<compile_context>
chip_gen: v7x
topology: tpu7x:2x2x1
jax: 0.10.0
libtpu: 0.0.40
codegen_flags: <defaults>
</compile_context>

<pallas_src>
import jax
import jax.numpy as jnp
from jax.experimental import pallas as pl
from jax.experimental.pallas import tpu as pltpu

LEAKY_SLOPE = 0.2


def _round_up(x, m):
    return (x + m - 1) // m * m


def _leaky_relu(x, slope=LEAKY_SLOPE):
    return jnp.where(x > 0, x, slope * x)


def _make_kernel(h2p, h1p):
    """Kernel factory closing over the (static) padded widths of layers 2/3."""

    def kernel(x_ref, w1_ref, w2_ref, w3_ref, bw_ref, o_ref, acc_ref):
        # x_ref : [TB, KT]     input batch tile (zero padded), any float dtype
        # w1_ref: [KT, H4P]    bf16 layer-1 weight K-tile, [in, out], zero padded
        # w2_ref: [H4P, H2P]   bf16 layer-2 weight, [in, out], zero padded
        # w3_ref: [H2P, H1P]   bf16 layer-3 weight, [in, out], zero padded
        # bw_ref: [5, H4P]     f32 rows: b1, b2, b3, w4-as-lane-row, [b4,0,...]
        # o_ref : [TB, 1]      f32 logit per row
        # acc_ref:[TB, H4P]    f32 layer-1 accumulator (VMEM scratch)
        k = pl.program_id(1)
        nk = pl.num_programs(1)

        @pl.when(k == 0)
        def _init():
            acc_ref[...] = jnp.zeros_like(acc_ref)

        # Layer 1 partial product for this K tile (bf16 MXU, f32 accumulation).
        acc_ref[...] += jnp.dot(x_ref[...].astype(jnp.bfloat16), w1_ref[...],
                                preferred_element_type=jnp.float32)

        @pl.when(k == nk - 1)
        def _finish():
            # Layer 1 epilogue: bias + LeakyReLU in f32.
            h = _leaky_relu(acc_ref[...] + bw_ref[0:1, :])

            # Layer 2
            h = jnp.dot(h.astype(jnp.bfloat16), w2_ref[...],
                        preferred_element_type=jnp.float32)
            h = _leaky_relu(h + bw_ref[1:2, 0:h2p])

            # Layer 3
            h = jnp.dot(h.astype(jnp.bfloat16), w3_ref[...],
                        preferred_element_type=jnp.float32)
            h = _leaky_relu(h + bw_ref[2:3, 0:h1p])

            # Layer 4 (output width 1): VPU multiply + XLU lane reduction.
            # Row 4 of bw is [b4, 0, ..., 0] so the reduction also adds b4.
            # Padded lanes of h and of the stored rows are exact zeros.
            y = jnp.sum(h * bw_ref[3:4, 0:h1p] + bw_ref[4:5, 0:h1p],
                        axis=-1, keepdims=True)               # [TB, 1]
            o_ref[...] = y.astype(o_ref.dtype)

    return kernel


def prepare_params(params):
    """One-time packing of PyTorch-style [(W[out,in], b[out]), ...] params.

    Outside the hot path: pre-transpose to [in, out], zero-pad each layer to
    its OWN lane-rounded width, cast MXU weights to bf16, and pack biases plus
    the layer-4 weight row (and b4) into a single f32 slab.
    """
    ws = [jnp.asarray(w, jnp.float32) for (w, _) in params]
    bs = [jnp.asarray(b, jnp.float32) for (_, b) in params]
    i_dim = ws[0].shape[1]
    h4, h2, h1 = ws[0].shape[0], ws[1].shape[0], ws[2].shape[0]
    K1P = _round_up(i_dim, 128)
    H4P = _round_up(h4, 128)
    H2P = _round_up(h2, 128)
    H1P = _round_up(h1, 128)

    def pad2(a, rows, cols):
        return jnp.pad(a, ((0, rows - a.shape[0]), (0, cols - a.shape[1])))

    w1 = pad2(ws[0].T, K1P, H4P).astype(jnp.bfloat16)    # [K1P, H4P]
    w2 = pad2(ws[1].T, H4P, H2P).astype(jnp.bfloat16)    # [H4P, H2P]
    w3 = pad2(ws[2].T, H2P, H1P).astype(jnp.bfloat16)    # [H2P, H1P]

    def padrow(v, width):
        v = v.reshape(-1)
        return jnp.pad(v, (0, width - v.shape[0]))

    bw = jnp.stack([
        padrow(bs[0], H4P),                  # b1  (real width 4h)
        padrow(bs[1], H4P),                  # b2  (real width 2h)
        padrow(bs[2], H4P),                  # b3  (real width h)
        padrow(ws[3].reshape(-1), H4P),      # layer-4 weight as a lane row
        padrow(bs[3], H4P),                  # [b4, 0, ..., 0]
    ], axis=0)                               # [5, H4P] f32

    dims = dict(i_dim=i_dim, K1P=K1P, H4P=H4P, H2P=H2P, H1P=H1P)
    return (w1, w2, w3, bw), dims


def _choose_batch_tile(B, max_tile=256):
    """Pick a batch tile (multiple of 8) dividing round_up(B, 8); prefer >= 2
    tiles so v7x's two TensorCores both get work, and keep padding overshoot
    at zero."""
    B8 = _round_up(B, 8)
    cap = min(max_tile, B8)
    if B8 >= 16:
        cap = min(cap, max(8, (B8 // 2) // 8 * 8))
    tb = cap
    while tb > 8 and B8 % tb != 0:
        tb -= 8
    return tb, B8


def _choose_k_tile(K1P, max_tile=2048):
    """Pick a layer-1 K tile (multiple of 128) dividing K1P."""
    if K1P <= max_tile:
        return K1P
    kt = max_tile - (max_tile % 128)
    while kt > 128 and K1P % kt != 0:
        kt -= 128
    return kt


def discriminator_forward(x, packed, dims, *, max_batch_tile=256, max_k_tile=2048):
    """x: [B, i_dim] float32 or bfloat16 (row-major flatten of (C, H, W))."""
    w1, w2, w3, bw = packed
    i_dim = dims["i_dim"]
    K1P, H4P, H2P, H1P = dims["K1P"], dims["H4P"], dims["H2P"], dims["H1P"]
    B = x.shape[0]
    assert x.shape[1] == i_dim, (x.shape, i_dim)

    TB, B_pad = _choose_batch_tile(B, max_batch_tile)
    KT = _choose_k_tile(K1P, max_k_tile)
    nk = K1P // KT

    # Pad batch / features with zeros; keep the incoming dtype (no extra cast
    # pass — if the producer emits bf16 it is consumed as-is).
    x_p = jnp.pad(x, ((0, B_pad - B), (0, K1P - x.shape[1])))
    x_bytes = jnp.dtype(x_p.dtype).itemsize

    grid = (B_pad // TB, nk)

    # Explicit scoped-VMEM budget: x tile x2, w1 tile x buffer_count,
    # single-buffered invariant weights, output x2, accumulator scratch,
    # live f32 intermediates, plus headroom.
    w1_bufs = 2 if nk > 1 else 1
    vmem_needed = (2 * TB * KT * x_bytes
                   + w1_bufs * KT * H4P * 2
                   + H4P * H2P * 2 + H2P * H1P * 2 + 5 * H4P * 4
                   + 2 * TB * 4
                   + TB * H4P * 4
                   + TB * (H4P + H2P + H1P) * 4)
    vmem_limit = min(int(vmem_needed * 1.5) + (4 << 20), 100 << 20)

    flops = 2 * B_pad * (K1P * H4P + H4P * H2P + H2P * H1P + H1P)
    bytes_accessed = (x_p.size * x_bytes + w1.size * 2 + w2.size * 2
                      + w3.size * 2 + bw.size * 4 + B_pad * 4)

    kernel = _make_kernel(H2P, H1P)
    w1_mode = pl.Buffered(2) if nk > 1 else pl.Buffered(1)

    out = pl.pallas_call(
        kernel,
        out_shape=jax.ShapeDtypeStruct((B_pad, 1), jnp.float32),
        grid=grid,
        in_specs=[
            # x: varies with both batch and K tiles -> default double buffering.
            pl.BlockSpec((TB, KT), lambda i, k: (i, k)),
            # w1: varies only with K; single-buffered when there is one K tile.
            pl.BlockSpec((KT, H4P), lambda i, k: (k, 0), pipeline_mode=w1_mode),
            # Grid-invariant weights/biases: single-buffered, stay VMEM resident.
            pl.BlockSpec((H4P, H2P), lambda i, k: (0, 0),
                         pipeline_mode=pl.Buffered(1)),
            pl.BlockSpec((H2P, H1P), lambda i, k: (0, 0),
                         pipeline_mode=pl.Buffered(1)),
            pl.BlockSpec((5, H4P), lambda i, k: (0, 0),
                         pipeline_mode=pl.Buffered(1)),
        ],
        out_specs=pl.BlockSpec((TB, 1), lambda i, k: (i, 0)),
        scratch_shapes=[pltpu.VMEM((TB, H4P), jnp.float32)],
        compiler_params=pltpu.CompilerParams(
            dimension_semantics=("parallel", "arbitrary"),
            vmem_limit_bytes=vmem_limit,
        ),
        cost_estimate=pl.CostEstimate(
            flops=flops, transcendentals=0, bytes_accessed=bytes_accessed),
    )(x_p, w1, w2, w3, bw)

    # Slice off batch padding; output already has a single logit column.
    return out[:B, :]


def init_linear_params(key, in_dim, out_dim):
    """Deterministic PyTorch-style init: U(-1/sqrt(in), 1/sqrt(in))."""
    kw, kb = jax.random.split(key)
    bound = 1.0 / jnp.sqrt(jnp.float32(in_dim))
    w = jax.random.uniform(kw, (out_dim, in_dim), jnp.float32, -bound, bound)
    b = jax.random.uniform(kb, (out_dim,), jnp.float32, -bound, bound)
    return w, b


def reference_forward(x, params):
    h = x
    for i, (w, b) in enumerate(params):
        h = h @ w.T + b
        if i < len(params) - 1:
            h = jnp.where(h > 0, h, LEAKY_SLOPE * h)
    return h


if __name__ == "__main__":
    # Small shapes consistent with the module: image 8x8x3 -> i_dim = 192,
    # h_dim = 32  => layers: 192 -> 128 -> 64 -> 32 -> 1, batch = 2.
    B = 2
    C, H, W = 3, 8, 8
    i_dim = C * H * W
    h_dim = 32

    key = jax.random.PRNGKey(0)
    k_x, k1, k2, k3, k4 = jax.random.split(key, 5)

    # Input image in NCHW, flattened to [B, C*H*W] exactly as PyTorch sees it.
    img = jax.random.normal(k_x, (B, C, H, W), jnp.float32)
    x = img.reshape(B, i_dim)

    layer_dims = [(i_dim, h_dim * 4), (h_dim * 4, h_dim * 2),
                  (h_dim * 2, h_dim), (h_dim, 1)]
    params = [init_linear_params(k, di, do)
              for k, (di, do) in zip([k1, k2, k3, k4], layer_dims)]

    # One-time packing (pre-transpose / per-layer pad / bf16 cast) outside the
    # hot path; the packed slabs are closed over by the jitted forward.
    packed, dims = prepare_params(params)
    fwd = jax.jit(lambda xx: discriminator_forward(xx, packed, dims))

    out = jax.block_until_ready(fwd(x))

    ref = reference_forward(x, params)
    assert out.shape == (B, 1), out.shape
    # bf16 MXU operands (f32 accumulation) -> compare to the pure-f32 reference
    # with a correspondingly looser tolerance.
    assert jnp.allclose(out, ref, atol=5e-2, rtol=5e-2), (out, ref)

    print("KERNEL_OK")
</pallas_src>

<mosaic_0001>
module attributes {stable_mosaic.version = 11 : i64} {
  func.func @kernel(%arg0: i32, %arg1: i32, %arg2: memref<8x256xf32, #tpu.memory_space<vmem>>, %arg3: memref<256x128xbf16, #tpu.memory_space<vmem>>, %arg4: memref<128x128xbf16, #tpu.memory_space<vmem>>, %arg5: memref<128x128xbf16, #tpu.memory_space<vmem>>, %arg6: memref<5x128xf32, #tpu.memory_space<vmem>>, %arg7: memref<8x1xf32, #tpu.memory_space<vmem>>, %arg8: memref<8x128xf32, #tpu.memory_space<vmem>>) attributes {dimension_semantics = [#tpu.dimension_semantics<parallel>, #tpu.dimension_semantics<arbitrary>], iteration_bounds = array<i64: 1, 1>, scalar_prefetch = 0 : i64, scratch_operands = 1 : i64, tpu.core_type = #tpu.core_type<tc>, window_params = [{transform_indices = @transform_0, window_bounds = array<i64: 8, 256>}, {pipeline_mode = #tpu.pipeline_mode<synchronous>, transform_indices = @transform_1, window_bounds = array<i64: 256, 128>}, {pipeline_mode = #tpu.pipeline_mode<synchronous>, transform_indices = @transform_2, window_bounds = array<i64: 128, 128>}, {pipeline_mode = #tpu.pipeline_mode<synchronous>, transform_indices = @transform_3, window_bounds = array<i64: 128, 128>}, {pipeline_mode = #tpu.pipeline_mode<synchronous>, transform_indices = @transform_4, window_bounds = array<i64: 5, 128>}, {transform_indices = @transform_5, window_bounds = array<i64: 8, 1>}]} {
    %c0_i32 = arith.constant 0 : i32
    %0 = arith.cmpi eq, %arg1, %c0_i32 : i32
    %1 = arith.extui %0 : i1 to i32
    %c0_i32_0 = arith.constant 0 : i32
    %2 = arith.cmpi ne, %1, %c0_i32_0 : i32
    scf.if %2 {
      %cst_10 = arith.constant 0.000000e+00 : f32
      %13 = vector.broadcast %cst_10 : f32 to vector<8x128xf32>
      %c0_11 = arith.constant 0 : index
      %c0_12 = arith.constant 0 : index
      %14 = vector.load %arg8[%c0_11, %c0_12] : memref<8x128xf32, #tpu.memory_space<vmem>>, vector<8x128xf32>
      tpu.vector_store %arg8[%c0_11, %c0_12], %13 {strides = array<i32>} : memref<8x128xf32, #tpu.memory_space<vmem>>, vector<8x128xf32>,
    } else {
    }
    %c0 = arith.constant 0 : index
    %c0_1 = arith.constant 0 : index
    %3 = vector.load %arg8[%c0, %c0_1] : memref<8x128xf32, #tpu.memory_space<vmem>>, vector<8x128xf32>
    %c0_2 = arith.constant 0 : index
    %c0_3 = arith.constant 0 : index
    %4 = vector.load %arg2[%c0_2, %c0_3] : memref<8x256xf32, #tpu.memory_space<vmem>>, vector<8x256xf32>
    %5 = arith.truncf %4 : vector<8x256xf32> to vector<8x256xbf16>
    %c0_4 = arith.constant 0 : index
    %c0_5 = arith.constant 0 : index
    %6 = vector.load %arg3[%c0_4, %c0_5] : memref<256x128xbf16, #tpu.memory_space<vmem>>, vector<256x128xbf16>
    %cst = arith.constant dense<0.000000e+00> : vector<8x128xf32>
    %7 = tpu.matmul %5, %6, %cst {dimension_numbers = #tpu.dot_dimension_numbers<[1], [0], [0], [1], [0, 0, 1, 1], [], []>} : vector<8x256xbf16>, vector<256x128xbf16>, vector<8x128xf32> -> vector<8x128xf32>
    %8 = arith.addf %3, %7 : vector<8x128xf32>
    %c0_6 = arith.constant 0 : index
    %c0_7 = arith.constant 0 : index
    %9 = vector.load %arg8[%c0_6, %c0_7] : memref<8x128xf32, #tpu.memory_space<vmem>>, vector<8x128xf32>
    tpu.vector_store %arg8[%c0_6, %c0_7], %8 {strides = array<i32>} : memref<8x128xf32, #tpu.memory_space<vmem>>, vector<8x128xf32>,
    %c0_i32_8 = arith.constant 0 : i32
    %10 = arith.cmpi eq, %arg1, %c0_i32_8 : i32
    %11 = arith.extui %10 : i1 to i32
    %c0_i32_9 = arith.constant 0 : i32
    %12 = arith.cmpi ne, %11, %c0_i32_9 : i32
    scf.if %12 {
      %c0_10 = arith.constant 0 : index
      %c0_11 = arith.constant 0 : index
      %13 = vector.load %arg8[%c0_10, %c0_11] : memref<8x128xf32, #tpu.memory_space<vmem>>, vector<8x128xf32>
      %c0_12 = arith.constant 0 : index
      %c0_13 = arith.constant 0 : index
      %14 = vector.load %arg6[%c0_12, %c0_13] : memref<5x128xf32, #tpu.memory_space<vmem>>, vector<1x128xf32>
      %15 = vector.broadcast %14 : vector<1x128xf32> to vector<8x128xf32>
      %16 = arith.addf %13, %15 : vector<8x128xf32>
      %cst_14 = arith.constant 0.000000e+00 : f32
      %17 = vector.broadcast %cst_14 : f32 to vector<8x128xf32>
      %18 = arith.cmpf ogt, %16, %17 : vector<8x128xf32>
      %cst_15 = arith.constant 2.000000e-01 : f32
      %19 = vector.broadcast %cst_15 : f32 to vector<8x128xf32>
      %20 = arith.mulf %19, %16 : vector<8x128xf32>
      %21 = arith.select %18, %16, %20 : vector<8x128xi1>, vector<8x128xf32>
      %22 = arith.truncf %21 : vector<8x128xf32> to vector<8x128xbf16>
      %c0_16 = arith.constant 0 : index
      %c0_17 = arith.constant 0 : index
      %23 = vector.load %arg4[%c0_16, %c0_17] : memref<128x128xbf16, #tpu.memory_space<vmem>>, vector<128x128xbf16>
      %cst_18 = arith.constant dense<0.000000e+00> : vector<8x128xf32>
      %24 = tpu.matmul %22, %23, %cst_18 {dimension_numbers = #tpu.dot_dimension_numbers<[1], [0], [0], [1], [0, 0, 1, 1], [], []>} : vector<8x128xbf16>, vector<128x128xbf16>, vector<8x128xf32> -> vector<8x128xf32>
      %c1 = arith.constant 1 : index
      %c0_19 = arith.constant 0 : index
      %25 = vector.load %arg6[%c1, %c0_19] : memref<5x128xf32, #tpu.memory_space<vmem>>, vector<1x128xf32>
      %26 = vector.broadcast %25 : vector<1x128xf32> to vector<8x128xf32>
      %27 = arith.addf %24, %26 : vector<8x128xf32>
      %cst_20 = arith.constant 0.000000e+00 : f32
      %28 = vector.broadcast %cst_20 : f32 to vector<8x128xf32>
      %29 = arith.cmpf ogt, %27, %28 : vector<8x128xf32>
      %cst_21 = arith.constant 2.000000e-01 : f32
      %30 = vector.broadcast %cst_21 : f32 to vector<8x128xf32>
      %31 = arith.mulf %30, %27 : vector<8x128xf32>
      %32 = arith.select %29, %27, %31 : vector<8x128xi1>, vector<8x128xf32>
      %33 = arith.truncf %32 : vector<8x128xf32> to vector<8x128xbf16>
      %c0_22 = arith.constant 0 : index
      %c0_23 = arith.constant 0 : index
      %34 = vector.load %arg5[%c0_22, %c0_23] : memref<128x128xbf16, #tpu.memory_space<vmem>>, vector<128x128xbf16>
      %cst_24 = arith.constant dense<0.000000e+00> : vector<8x128xf32>
      %35 = tpu.matmul %33, %34, %cst_24 {dimension_numbers = #tpu.dot_dimension_numbers<[1], [0], [0], [1], [0, 0, 1, 1], [], []>} : vector<8x128xbf16>, vector<128x128xbf16>, vector<8x128xf32> -> vector<8x128xf32>
      %c2 = arith.constant 2 : index
      %c0_25 = arith.constant 0 : index
      %36 = vector.load %arg6[%c2, %c0_25] : memref<5x128xf32, #tpu.memory_space<vmem>>, vector<1x128xf32>
      %37 = vector.broadcast %36 : vector<1x128xf32> to vector<8x128xf32>
      %38 = arith.addf %35, %37 : vector<8x128xf32>
      %cst_26 = arith.constant 0.000000e+00 : f32
      %39 = vector.broadcast %cst_26 : f32 to vector<8x128xf32>
      %40 = arith.cmpf ogt, %38, %39 : vector<8x128xf32>
      %cst_27 = arith.constant 2.000000e-01 : f32
      %41 = vector.broadcast %cst_27 : f32 to vector<8x128xf32>
      %42 = arith.mulf %41, %38 : vector<8x128xf32>
      %43 = arith.select %40, %38, %42 : vector<8x128xi1>, vector<8x128xf32>
      %c3 = arith.constant 3 : index
      %c0_28 = arith.constant 0 : index
      %44 = vector.load %arg6[%c3, %c0_28] : memref<5x128xf32, #tpu.memory_space<vmem>>, vector<1x128xf32>
      %45 = vector.broadcast %44 : vector<1x128xf32> to vector<8x128xf32>
      %46 = arith.mulf %43, %45 : vector<8x128xf32>
      %c4 = arith.constant 4 : index
      %c0_29 = arith.constant 0 : index
      %47 = vector.load %arg6[%c4, %c0_29] : memref<5x128xf32, #tpu.memory_space<vmem>>, vector<1x128xf32>
      %48 = vector.broadcast %47 : vector<1x128xf32> to vector<8x128xf32>
      %49 = arith.addf %46, %48 : vector<8x128xf32>
      %cst_30 = arith.constant dense<0.000000e+00> : vector<8xf32>
      %50 = vector.multi_reduction <add>, %49, %cst_30 [1] : vector<8x128xf32> to vector<8xf32>
      %51 = vector.shape_cast %50 : vector<8xf32> to vector<8x1xf32>
      %c0_31 = arith.constant 0 : index
      %c0_32 = arith.constant 0 : index
      %52 = vector.load %arg7[%c0_31, %c0_32] : memref<8x1xf32, #tpu.memory_space<vmem>>, vector<8x1xf32>
      tpu.vector_store %arg7[%c0_31, %c0_32], %51 {strides = array<i32>} : memref<8x1xf32, #tpu.memory_space<vmem>>, vector<8x1xf32>,
    } else {
    }
    return
  }
  func.func @transform_0(%arg0: i32, %arg1: i32) -> (i32, i32) {
    %c0_i32 = arith.constant 0 : i32
    return %arg0, %arg1 : i32, i32
  }
  func.func @transform_1(%arg0: i32, %arg1: i32) -> (i32, i32) {
    %c0_i32 = arith.constant 0 : i32
    %c0_i32_0 = arith.constant 0 : i32
    return %arg1, %c0_i32 : i32, i32
  }
  func.func @transform_2(%arg0: i32, %arg1: i32) -> (i32, i32) {
    %c0_i32 = arith.constant 0 : i32
    %c0_i32_0 = arith.constant 0 : i32
    %c0_i32_1 = arith.constant 0 : i32
    return %c0_i32, %c0_i32_0 : i32, i32
  }
  func.func @transform_3(%arg0: i32, %arg1: i32) -> (i32, i32) {
    %c0_i32 = arith.constant 0 : i32
    %c0_i32_0 = arith.constant 0 : i32
    %c0_i32_1 = arith.constant 0 : i32
    return %c0_i32, %c0_i32_0 : i32, i32
  }
  func.func @transform_4(%arg0: i32, %arg1: i32) -> (i32, i32) {
    %c0_i32 = arith.constant 0 : i32
    %c0_i32_0 = arith.constant 0 : i32
    %c0_i32_1 = arith.constant 0 : i32
    return %c0_i32, %c0_i32_0 : i32, i32
  }
  func.func @transform_5(%arg0: i32, %arg1: i32) -> (i32, i32) {
    %c0_i32 = arith.constant 0 : i32
    %c0_i32_0 = arith.constant 0 : i32
    return %arg0, %c0_i32 : i32, i32
  }
}

</mosaic_0001>

<llo_original>
// kernel: _lambda_.1
$region0: #{_lambda_.1}
  #allocation0 [shape = 'u32[]', space=smem, size = 0x4, offset = 0x4, fixed_abs, tag = 'smem constant byte address 0x4 - core index']
  #allocation1 [shape = 'u32[144,128]{1,0:T(1,128)}', space=vmem, size = 0x12000, scoped, tag = 'internal scratch']
  #allocation2 [shape = 'f32[8,128]{1,0:T(8,128)}', space=vmem, size = 0x1000, scoped, tag = 'scratch operand']
  %s0 = inlined_call_operand.vmem [shape: f32[8,256], index: 0, kind: input, shape index: {}]
  %s1 = inlined_call_operand.hbm [shape: bf16[256,128], index: 1, kind: input, shape index: {}]
  %s2 = inlined_call_operand.hbm [shape: bf16[128,128], index: 2, kind: input, shape index: {}]
  %s3 = inlined_call_operand.hbm [shape: bf16[128,128], index: 3, kind: input, shape index: {}]
  %s4 = inlined_call_operand.vmem [shape: f32[5,128], index: 4, kind: input, shape index: {}]
  %s5 = inlined_call_operand.vmem [shape: f32[8,1], index: 5, kind: output, shape index: {}]
  %s6 = sld [smem:[#allocation0]]
  $region50: #{_lambda_.1} parent=0
    _
  %s8 = ssub.s32 1, %s6
  %s9 = scalar_select 0, %s8, %s6
  $region1: #{_lambda_.1} parent=0
    #allocation3 [shape = 'u8[65536]{0}', space=vmem, size = 0x10000, scoped, tag = 'input window, operand 1, single buffered']
    #allocation4 [shape = 's32[1]{0}', space=sflag, size = 0x4, scoped, tag = 'scoped memory for _lambda_.1']
    #allocation5 [shape = 'u8[32768]{0}', space=vmem, size = 0x8000, scoped, tag = 'input window, operand 2, single buffered']
    #allocation6 [shape = 's32[1]{0}', space=sflag, size = 0x4, scoped, tag = 'scoped memory for _lambda_.1']
    #allocation7 [shape = 'u8[32768]{0}', space=vmem, size = 0x8000, scoped, tag = 'input window, operand 3, single buffered']
    %10 = vsyncpa [#allocation4], 0
    %11 = vsyncpa [#allocation6], 0
    // Predicated region
    $region2: #{_lambda_.1} parent=1 // pred_check
      _
    $region3: #{_lambda_.1} parent=1 // pred_check_branch
      %13 = sbr.rel (0) target = $region5
    $region4: #{_lambda_.1} parent=1 // pred_region
      _
    $region5: #{_lambda_.1} parent=1 // pred_fallthru
      _
    // Predicated region
    $region6: #{_lambda_.1} parent=1 // pred_check
      _
    $region7: #{_lambda_.1} parent=1 // pred_check_branch
      %15 = sbr.rel (0) target = $region9
    $region8: #{_lambda_.1} parent=1 // pred_region
      %s17 = ssub.s32 2048, 2048
      %18 = vsyncadd [#allocation4], %s17
      %s19 = sshll.u32 [#allocation3], 4
      %s20 = int_to_ptr.vmem [resolvable:$true] %s19
      %25 = dma.hbm_to_vmem [thread:$0]  %s1, 2048, %s20, [#allocation4], 64, 64, 4
    $region9: #{_lambda_.1} parent=1 // pred_fallthru
      _
    // Predicated region
    $region10: #{_lambda_.1} parent=1 // pred_check
      _
    $region11: #{_lambda_.1} parent=1 // pred_check_branch
      %27 = sbr.rel (0) target = $region13
    $region12: #{_lambda_.1} parent=1 // pred_region
      %s29 = ssub.s32 1024, 1024
      %30 = vsyncadd [#allocation6], %s29
      %s31 = sshll.u32 [#allocation5], 4
      %s32 = int_to_ptr.vmem [resolvable:$true] %s31
      %37 = dma.hbm_to_vmem [thread:$0]  %s2, 1024, %s32, [#allocation6], 64, 64, 4
    $region13: #{_lambda_.1} parent=1 // pred_fallthru
      _
    // Predicated region
    $region14: #{_lambda_.1} parent=1 // pred_check
      _
    $region15: #{_lambda_.1} parent=1 // pred_check_branch
      %39 = sbr.rel (0) target = $region17
    $region16: #{_lambda_.1} parent=1 // pred_region
      %s41 = ssub.s32 1024, 1024
      %42 = vsyncadd [#allocation6], %s41
      %s43 = sshll.u32 [#allocation7], 4
      %s44 = int_to_ptr.vmem [resolvable:$true] %s43
      %49 = dma.hbm_to_vmem [thread:$0]  %s3, 1024, %s44, [#allocation6], 64, 64, 4
    $region17: #{_lambda_.1} parent=1 // pred_fallthru
      _
    // Predicated region
    $region18: #{_lambda_.1} parent=1 // pred_check
      _
    $region19: #{_lambda_.1} parent=1 // pred_check_branch
      %51 = sbr.rel (0) target = $region21
    $region20: #{_lambda_.1} parent=1 // pred_region
      _
    $region21: #{_lambda_.1} parent=1 // pred_fallthru
      _
    // Predicated region
    $region22: #{_lambda_.1} parent=1 // pred_check
      _
    $region23: #{_lambda_.1} parent=1 // pred_check_branch
      %53 = sbr.rel (0) target = $region25
    $region24: #{_lambda_.1} parent=1 // pred_region
      %54 = dma.done [#allocation4], 2048
    $region25: #{_lambda_.1} parent=1 // pred_fallthru
      _
    // Predicated region
    $region26: #{_lambda_.1} parent=1 // pred_check
      _
    $region27: #{_lambda_.1} parent=1 // pred_check_branch
      %56 = sbr.rel (0) target = $region29
    $region28: #{_lambda_.1} parent=1 // pred_region
      %57 = dma.done [#allocation6], 1024
    $region29: #{_lambda_.1} parent=1 // pred_fallthru
      _
    // Predicated region
    $region30: #{_lambda_.1} parent=1 // pred_check
      _
    $region31: #{_lambda_.1} parent=1 // pred_check_branch
      %59 = sbr.rel (0) target = $region33
    $region32: #{_lambda_.1} parent=1 // pred_region
      %60 = dma.done [#allocation6], 1024
    $region33: #{_lambda_.1} parent=1 // pred_fallthru
      _
    %p62 = scmp.eq.s32.totalorder 0, 0
    // Predicated region
    $region34: #{_lambda_.1} parent=1 // pred_check
      %p63 = pneg %p62
    $region35: #{_lambda_.1} parent=1 // pred_check_branch
      %65 = sbr.rel (%p63) target = $region37
    $region36: #{_lambda_.1} parent=1 // pred_region
      %66 = vst [vmem:[#allocation2] sm:$0xff] 0.0
    $region37: #{_lambda_.1} parent=1 // pred_fallthru
      _
    %v67 = vld [vmem:[#allocation2] sm:$0xff]
    %v68 = vld [vmem:[%s0] sm:$0xff]
    %v69 = vld [vmem:[%s0 + $0x8] sm:$0xff]
    %v70 = vpack.c.bf16 %v68, %v68
    %v71 = vpack.c.bf16 %v69, %v69
    %v72 = vld [vmem:[#allocation3] sm:$0xf]
    %v73 = vld [vmem:[#allocation3 + $0x4] sm:$0xf]
    %v74 = vld [vmem:[#allocation3 + $0x8] sm:$0xf]
    %v75 = vld [vmem:[#allocation3 + $0xc] sm:$0xf]
    %v76 = vld [vmem:[#allocation3 + $0x10] sm:$0xf]
    %v77 = vld [vmem:[#allocation3 + $0x14] sm:$0xf]
    %v78 = vld [vmem:[#allocation3 + $0x18] sm:$0xf]
    %v79 = vld [vmem:[#allocation3 + $0x1c] sm:$0xf]
    %v80 = vld [vmem:[#allocation3 + $0x20] sm:$0xf]
    %v81 = vld [vmem:[#allocation3 + $0x24] sm:$0xf]
    %v82 = vld [vmem:[#allocation3 + $0x28] sm:$0xf]
    %v83 = vld [vmem:[#allocation3 + $0x2c] sm:$0xf]
    %v84 = vld [vmem:[#allocation3 + $0x30] sm:$0xf]
    %v85 = vld [vmem:[#allocation3 + $0x34] sm:$0xf]
    %v86 = vld [vmem:[#allocation3 + $0x38] sm:$0xf]
    %v87 = vld [vmem:[#allocation3 + $0x3c] sm:$0xf]
    %v88 = vld [vmem:[#allocation3 + $0x40] sm:$0xf]
    %v89 = vld [vmem:[#allocation3 + $0x44] sm:$0xf]
    %v90 = vld [vmem:[#allocation3 + $0x48] sm:$0xf]
    %v91 = vld [vmem:[#allocation3 + $0x4c] sm:$0xf]
    %v92 = vld [vmem:[#allocation3 + $0x50] sm:$0xf]
    %v93 = vld [vmem:[#allocation3 + $0x54] sm:$0xf]
    %v94 = vld [vmem:[#allocation3 + $0x58] sm:$0xf]
    %v95 = vld [vmem:[#allocation3 + $0x5c] sm:$0xf]
    %v96 = vld [vmem:[#allocation3 + $0x60] sm:$0xf]
    %v97 = vld [vmem:[#allocation3 + $0x64] sm:$0xf]
    %v98 = vld [vmem:[#allocation3 + $0x68] sm:$0xf]
    %v99 = vld [vmem:[#allocation3 + $0x6c] sm:$0xf]
    %v100 = vld [vmem:[#allocation3 + $0x70] sm:$0xf]
    %v101 = vld [vmem:[#allocation3 + $0x74] sm:$0xf]
    %v102 = vld [vmem:[#allocation3 + $0x78] sm:$0xf]
    %v103 = vld [vmem:[#allocation3 + $0x7c] sm:$0xf]
    %v136 = vunpack.c.l.b16 %v72
    %v137 = vunpack.c.l.b16 %v73
    %v138 = vunpack.c.l.b16 %v74
    %v139 = vunpack.c.l.b16 %v75
    %v140 = vunpack.c.l.b16 %v76
    %v141 = vunpack.c.l.b16 %v77
    %v142 = vunpack.c.l.b16 %v78
    %v143 = vunpack.c.l.b16 %v79
    %v144 = vunpack.c.l.b16 %v80
    %v145 = vunpack.c.l.b16 %v81
    %v146 = vunpack.c.l.b16 %v82
    %v147 = vunpack.c.l.b16 %v83
    %v148 = vunpack.c.l.b16 %v84
    %v149 = vunpack.c.l.b16 %v85
    %v150 = vunpack.c.l.b16 %v86
    %v151 = vunpack.c.l.b16 %v87
    %v152 = vunpack.c.l.b16 %v88
    %v153 = vunpack.c.l.b16 %v89
    %v154 = vunpack.c.l.b16 %v90
    %v155 = vunpack.c.l.b16 %v91
    %v156 = vunpack.c.l.b16 %v92
    %v157 = vunpack.c.l.b16 %v93
    %v158 = vunpack.c.l.b16 %v94
    %v159 = vunpack.c.l.b16 %v95
    %v160 = vunpack.c.l.b16 %v96
    %v161 = vunpack.c.l.b16 %v97
    %v162 = vunpack.c.l.b16 %v98
    %v163 = vunpack.c.l.b16 %v99
    %v164 = vunpack.c.l.b16 %v100
    %v165 = vunpack.c.l.b16 %v101
    %v166 = vunpack.c.l.b16 %v102
    %v167 = vunpack.c.l.b16 %v103
    %v168 = vpack.c.b16 %v137, %v136
    %v169 = vpack.c.b16 %v139, %v138
    %v170 = vpack.c.b16 %v141, %v140
    %v171 = vpack.c.b16 %v143, %v142
    %v172 = vpack.c.b16 %v145, %v144
    %v173 = vpack.c.b16 %v147, %v146
    %v174 = vpack.c.b16 %v149, %v148
    %v175 = vpack.c.b16 %v151, %v150
    %v176 = vpack.c.b16 %v153, %v152
    %v177 = vpack.c.b16 %v155, %v154
    %v178 = vpack.c.b16 %v157, %v156
    %v179 = vpack.c.b16 %v159, %v158
    %v180 = vpack.c.b16 %v161, %v160
    %v181 = vpack.c.b16 %v163, %v162
    %v182 = vpack.c.b16 %v165, %v164
    %v183 = vpack.c.b16 %v167, %v166
    %200 = vmatprep.subr.bf16.mxu0 0
    %201 = vmatpush1.bf16.msra.mxu0 %v168
    %202 = vmatprep.subr.bf16.mxu0 0
    %203 = vmatpush1.bf16.msra.mxu0 %v169
    %204 = vmatprep.subr.bf16.mxu0 0
    %205 = vmatpush1.bf16.msra.mxu0 %v170
    %206 = vmatprep.subr.bf16.mxu0 0
    %207 = vmatpush1.bf16.msra.mxu0 %v171
    %208 = vmatprep.subr.bf16.mxu0 0
    %209 = vmatpush1.bf16.msra.mxu0 %v172
    %210 = vmatprep.subr.bf16.mxu0 0
    %211 = vmatpush1.bf16.msra.mxu0 %v173
    %212 = vmatprep.subr.bf16.mxu0 0
    %213 = vmatpush1.bf16.msra.mxu0 %v174
    %214 = vmatprep.subr.bf16.mxu0 0
    %215 = vmatpush1.bf16.msra.mxu0 %v175
    %216 = vmatprep.subr.bf16.mxu0 0
    %217 = vmatpush1.bf16.msra.mxu0 %v176
    %218 = vmatprep.subr.bf16.mxu0 0
    %219 = vmatpush1.bf16.msra.mxu0 %v177
    %220 = vmatprep.subr.bf16.mxu0 0
    %221 = vmatpush1.bf16.msra.mxu0 %v178
    %222 = vmatprep.subr.bf16.mxu0 0
    %223 = vmatpush1.bf16.msra.mxu0 %v179
    %224 = vmatprep.subr.bf16.mxu0 0
    %225 = vmatpush1.bf16.msra.mxu0 %v180
    %226 = vmatprep.subr.bf16.mxu0 0
    %227 = vmatpush1.bf16.msra.mxu0 %v181
    %228 = vmatprep.subr.bf16.mxu0 0
    %229 = vmatpush1.bf16.msra.mxu0 %v182
    %230 = vmatprep.subr.bf16.mxu0 0
    %231 = vmatpush1.bf16.msra.mxu0 %v183
    %232 = vmatprep.mubr.bf16.mxu0 %v71
    %233 = vmatmul.mubr.bf16.gmra.mrb[0].mxu0 %v70
    %v234 = vpop.f32.mrb[0].mxu0
    %v235 = vadd.f32 0.0, %v234
    %v236 = vpop.f32.mrb[0].mxu0
    %v237 = vpop.f32.mrb[0].mxu0
    %v238 = vpop.f32.mrb[0].mxu0
    %239 = vdwg.mxu0
    %v240 = vadd.f32 %v67, %v235
    %241 = vst [vmem:[#allocation2] sm:$0xff] %v240
    // Predicated region
    $region38: #{_lambda_.1} parent=1 // pred_check
      %p242 = pneg %p62
    $region39: #{_lambda_.1} parent=1 // pred_check_branch
      %244 = sbr.rel (%p242) target = $region41
    $region40: #{_lambda_.1} parent=1 // pred_region
      %v245 = vld [vmem:[#allocation2] sm:$0xff]
      %v246 = vld [vmem:[%s4] sm:$0x1]
      %v247 = vlaneseq
      %v248 = vshrl.u32 %v247, 7
      %v249 = vsub.s32 0, %v248
      %v250 = vrot.slane %v246, %v249
      %v251 = vadd.f32 %v245, %v250
      %vm252 = vcmp.gt.f32.partialorder %v251, 0.0
      %v253 = vmul.f32 %v251, 0.2
      %v254 = vsel %vm252, %v251, %v253
      %v255 = vpack.c.bf16 %v254, %v254
      %v256 = vld [vmem:[#allocation5] sm:$0xf]
      %v257 = vld [vmem:[#allocation5 + $0x4] sm:$0xf]
      %v258 = vld [vmem:[#allocation5 + $0x8] sm:$0xf]
      %v259 = vld [vmem:[#allocation5 + $0xc] sm:$0xf]
      %v260 = vld [vmem:[#allocation5 + $0x10] sm:$0xf]
      %v261 = vld [vmem:[#allocation5 + $0x14] sm:$0xf]
      %v262 = vld [vmem:[#allocation5 + $0x18] sm:$0xf]
      %v263 = vld [vmem:[#allocation5 + $0x1c] sm:$0xf]
      %v264 = vld [vmem:[#allocation5 + $0x20] sm:$0xf]
      %v265 = vld [vmem:[#allocation5 + $0x24] sm:$0xf]
      %v266 = vld [vmem:[#allocation5 + $0x28] sm:$0xf]
      %v267 = vld [vmem:[#allocation5 + $0x2c] sm:$0xf]
      %v268 = vld [vmem:[#allocation5 + $0x30] sm:$0xf]
      %v269 = vld [vmem:[#allocation5 + $0x34] sm:$0xf]
      %v270 = vld [vmem:[#allocation5 + $0x38] sm:$0xf]
      %v271 = vld [vmem:[#allocation5 + $0x3c] sm:$0xf]
      %v272 = vld [vmem:[%s4 + $0x1] sm:$0x1]
      %v273 = vlaneseq
      %v274 = vshrl.u32 %v273, 7
      %v275 = vsub.s32 0, %v274
      %v276 = vrot.slane %v272, %v275
      %v293 = vunpack.c.l.b16 %v256
      %v294 = vunpack.c.l.b16 %v257
      %v295 = vunpack.c.l.b16 %v258
      %v296 = vunpack.c.l.b16 %v259
      %v297 = vunpack.c.l.b16 %v260
      %v298 = vunpack.c.l.b16 %v261
      %v299 = vunpack.c.l.b16 %v262
      %v300 = vunpack.c.l.b16 %v263
      %v301 = vunpack.c.l.b16 %v264
      %v302 = vunpack.c.l.b16 %v265
      %v303 = vunpack.c.l.b16 %v266
      %v304 = vunpack.c.l.b16 %v267
      %v305 = vunpack.c.l.b16 %v268
      %v306 = vunpack.c.l.b16 %v269
      %v307 = vunpack.c.l.b16 %v270
      %v308 = vunpack.c.l.b16 %v271
      %v309 = vpack.c.b16 %v294, %v293
      %v310 = vpack.c.b16 %v296, %v295
      %v311 = vpack.c.b16 %v298, %v297
      %v312 = vpack.c.b16 %v300, %v299
      %v313 = vpack.c.b16 %v302, %v301
      %v314 = vpack.c.b16 %v304, %v303
      %v315 = vpack.c.b16 %v306, %v305
      %v316 = vpack.c.b16 %v308, %v307
      %325 = vmatprep.subr.bf16.mxu0 0
      %326 = vmatpush1.bf16.msra.mxu0 %v309
      %327 = vmatprep.subr.bf16.mxu0 0
      %328 = vmatpush1.bf16.msra.mxu0 %v310
      %329 = vmatprep.subr.bf16.mxu0 0
      %330 = vmatpush1.bf16.msra.mxu0 %v311
      %331 = vmatprep.subr.bf16.mxu0 0
      %332 = vmatpush1.bf16.msra.mxu0 %v312
      %333 = vmatprep.subr.bf16.mxu0 0
      %334 = vmatpush1.bf16.msra.mxu0 %v313
      %335 = vmatprep.subr.bf16.mxu0 0
      %336 = vmatpush1.bf16.msra.mxu0 %v314
      %337 = vmatprep.subr.bf16.mxu0 0
      %338 = vmatpush1.bf16.msra.mxu0 %v315
      %339 = vmatprep.subr.bf16.mxu0 0
      %340 = vmatpush1.bf16.msra.mxu0 %v316
      %341 = vmatprep.subr.bf16.mxu0 0
      %342 = vmatpush1.bf16.msra.mxu0 0
      %343 = vmatprep.subr.bf16.mxu0 0
      %344 = vmatpush1.bf16.msra.mxu0 0
      %345 = vmatprep.subr.bf16.mxu0 0
      %346 = vmatpush1.bf16.msra.mxu0 0
      %347 = vmatprep.subr.bf16.mxu0 0
      %348 = vmatpush1.bf16.msra.mxu0 0
      %349 = vmatprep.subr.bf16.mxu0 0
      %350 = vmatpush1.bf16.msra.mxu0 0
      %351 = vmatprep.subr.bf16.mxu0 0
      %352 = vmatpush1.bf16.msra.mxu0 0
      %353 = vmatprep.subr.bf16.mxu0 0
      %354 = vmatpush1.bf16.msra.mxu0 0
      %355 = vmatprep.subr.bf16.mxu0 0
      %356 = vmatpush1.bf16.msra.mxu0 0
      %357 = vmatprep.mubr.bf16.mxu0 0
      %358 = vmatmul.mubr.bf16.gmra.mrb[0].mxu0 %v255
      %v359 = vpop.f32.mrb[0].mxu0
      %v360 = vadd.f32 %v276, %v359
      %v361 = vpop.f32.mrb[0].mxu0
      %v362 = vpop.f32.mrb[0].mxu0
      %v363 = vpop.f32.mrb[0].mxu0
      %364 = vdwg.mxu0
      %vm365 = vcmp.gt.f32.partialorder %v360, 0.0
      %v366 = vmul.f32 %v360, 0.2
      %v367 = vsel %vm365, %v360, %v366
      %v368 = vpack.c.bf16 %v367, %v367
      %v369 = vld [vmem:[#allocation7] sm:$0xf]
      %v370 = vld [vmem:[#allocation7 + $0x4] sm:$0xf]
      %v371 = vld [vmem:[#allocation7 + $0x8] sm:$0xf]
      %v372 = vld [vmem:[#allocation7 + $0xc] sm:$0xf]
      %v373 = vld [vmem:[#allocation7 + $0x10] sm:$0xf]
      %v374 = vld [vmem:[#allocation7 + $0x14] sm:$0xf]
      %v375 = vld [vmem:[#allocation7 + $0x18] sm:$0xf]
      %v376 = vld [vmem:[#allocation7 + $0x1c] sm:$0xf]
      %v377 = vld [vmem:[#allocation7 + $0x20] sm:$0xf]
      %v378 = vld [vmem:[#allocation7 + $0x24] sm:$0xf]
      %v379 = vld [vmem:[#allocation7 + $0x28] sm:$0xf]
      %v380 = vld [vmem:[#allocation7 + $0x2c] sm:$0xf]
      %v381 = vld [vmem:[#allocation7 + $0x30] sm:$0xf]
      %v382 = vld [vmem:[#allocation7 + $0x34] sm:$0xf]
      %v383 = vld [vmem:[#allocation7 + $0x38] sm:$0xf]
      %v384 = vld [vmem:[#allocation7 + $0x3c] sm:$0xf]
      %v385 = vld [vmem:[%s4 + $0x2] sm:$0x1]
      %v386 = vlaneseq
      %v387 = vshrl.u32 %v386, 7
      %v388 = vsub.s32 0, %v387
      %v389 = vrot.slane %v385, %v388
      %v406 = vunpack.c.l.b16 %v369
      %v407 = vunpack.c.l.b16 %v370
      %v408 = vunpack.c.l.b16 %v371
      %v409 = vunpack.c.l.b16 %v372
      %v410 = vunpack.c.l.b16 %v373
      %v411 = vunpack.c.l.b16 %v374
      %v412 = vunpack.c.l.b16 %v375
      %v413 = vunpack.c.l.b16 %v376
      %v414 = vunpack.c.l.b16 %v377
      %v415 = vunpack.c.l.b16 %v378
      %v416 = vunpack.c.l.b16 %v379
      %v417 = vunpack.c.l.b16 %v380
      %v418 = vunpack.c.l.b16 %v381
      %v419 = vunpack.c.l.b16 %v382
      %v420 = vunpack.c.l.b16 %v383
      %v421 = vunpack.c.l.b16 %v384
      %v422 = vpack.c.b16 %v407, %v406
      %v423 = vpack.c.b16 %v409, %v408
      %v424 = vpack.c.b16 %v411, %v410
      %v425 = vpack.c.b16 %v413, %v412
      %v426 = vpack.c.b16 %v415, %v414
      %v427 = vpack.c.b16 %v417, %v416
      %v428 = vpack.c.b16 %v419, %v418
      %v429 = vpack.c.b16 %v421, %v420
      %438 = vmatprep.subr.bf16.mxu0 0
      %439 = vmatpush1.bf16.msra.mxu0 %v422
      %440 = vmatprep.subr.bf16.mxu0 0
      %441 = vmatpush1.bf16.msra.mxu0 %v423
      %442 = vmatprep.subr.bf16.mxu0 0
      %443 = vmatpush1.bf16.msra.mxu0 %v424
      %444 = vmatprep.subr.bf16.mxu0 0
      %445 = vmatpush1.bf16.msra.mxu0 %v425
      %446 = vmatprep.subr.bf16.mxu0 0
      %447 = vmatpush1.bf16.msra.mxu0 %v426
      %448 = vmatprep.subr.bf16.mxu0 0
      %449 = vmatpush1.bf16.msra.mxu0 %v427
      %450 = vmatprep.subr.bf16.mxu0 0
      %451 = vmatpush1.bf16.msra.mxu0 %v428
      %452 = vmatprep.subr.bf16.mxu0 0
      %453 = vmatpush1.bf16.msra.mxu0 %v429
      %454 = vmatprep.subr.bf16.mxu0 0
      %455 = vmatpush1.bf16.msra.mxu0 0
      %456 = vmatprep.subr.bf16.mxu0 0
      %457 = vmatpush1.bf16.msra.mxu0 0
      %458 = vmatprep.subr.bf16.mxu0 0
      %459 = vmatpush1.bf16.msra.mxu0 0
      %460 = vmatprep.subr.bf16.mxu0 0
      %461 = vmatpush1.bf16.msra.mxu0 0
      %462 = vmatprep.subr.bf16.mxu0 0
      %463 = vmatpush1.bf16.msra.mxu0 0
      %464 = vmatprep.subr.bf16.mxu0 0
      %465 = vmatpush1.bf16.msra.mxu0 0
      %466 = vmatprep.subr.bf16.mxu0 0
      %467 = vmatpush1.bf16.msra.mxu0 0
      %468 = vmatprep.subr.bf16.mxu0 0
      %469 = vmatpush1.bf16.msra.mxu0 0
      %470 = vmatprep.mubr.bf16.mxu0 0
      %471 = vmatmul.mubr.bf16.gmra.mrb[0].mxu0 %v368
      %v472 = vpop.f32.mrb[0].mxu0
      %v473 = vadd.f32 %v389, %v472
      %v474 = vpop.f32.mrb[0].mxu0
      %v475 = vpop.f32.mrb[0].mxu0
      %v476 = vpop.f32.mrb[0].mxu0
      %477 = vdwg.mxu0
      %vm478 = vcmp.gt.f32.partialorder %v473, 0.0
      %v479 = vmul.f32 %v473, 0.2
      %v480 = vsel %vm478, %v473, %v479
      %v481 = vld [vmem:[%s4 + $0x3] sm:$0x1]
      %v482 = vlaneseq
      %v483 = vshrl.u32 %v482, 7
      %v484 = vsub.s32 0, %v483
      %v485 = vrot.slane %v481, %v484
      %v486 = vmul.f32 %v480, %v485
      %v487 = vld [vmem:[%s4 + $0x4] sm:$0x1]
      %v488 = vlaneseq
      %v489 = vshrl.u32 %v488, 7
      %v490 = vsub.s32 0, %v489
      %v491 = vrot.slane %v487, %v490
      %v492 = vadd.f32 %v486, %v491
      %493 = vadd.xlane.f32.xlu0 %v492
      %v494 = vpop.xlane.xlu0 %493
      %vm495 = vcmask 7168
      %496 = vst.msk [vmem:[%s5] sm:$0xff] %vm495, %v494
    $region41: #{_lambda_.1} parent=1 // pred_fallthru
      _
    // Predicated region
    $region42: #{_lambda_.1} parent=1 // pred_check
      _
    $region43: #{_lambda_.1} parent=1 // pred_check_branch
      %498 = sbr.rel (0) target = $region45
    $region44: #{_lambda_.1} parent=1 // pred_region
      _
    $region45: #{_lambda_.1} parent=1 // pred_fallthru
      _
    // Predicated region
    $region46: #{_lambda_.1} parent=1 // pred_check
      _
    $region47: #{_lambda_.1} parent=1 // pred_check_branch
      %500 = sbr.rel (0) target = $region49
    $region48: #{_lambda_.1} parent=1 // pred_region
      _
    $region49: #{_lambda_.1} parent=1 // pred_fallthru
      _
    %501 = vsyncpa [#allocation4], 1
    %502 = vsyncpa [#allocation6], 1

</llo_original>
